<compile_context>
chip_gen: v7x
topology: tpu7x:2x2x1
jax: 0.10.0
libtpu: 0.0.40
codegen_flags: <defaults>
</compile_context>

<pallas_src>
import jax
import jax.numpy as jnp
from jax import lax
from jax.experimental import pallas as pl
from jax.experimental.pallas import tpu as pltpu


def hommd_kernel(xs_ref, xt_ref, out_ref, g_ref):
    step = pl.program_id(0)
    n_steps = pl.num_programs(0)

    xs = xs_ref[...].astype(jnp.float32)
    xt = xt_ref[...].astype(jnp.float32)

    # Center over the batch axis. Each feature column is visited exactly once
    # across the grid, so there is no repeated centering work.
    xs_c = xs - jnp.mean(xs, axis=0, keepdims=True)
    xt_c = xt - jnp.mean(xt, axis=0, keepdims=True)

    # Signed stack fuses source/target into ONE matmul; the minus sign on xt
    # propagates through the cubic power below.
    a = jnp.concatenate([xs_c, -xt_c], axis=0)          # (2N, tk)

    @pl.when(step == 0)
    def _():
        g_ref[...] = jnp.zeros_like(g_ref)
        out_ref[...] = jnp.zeros_like(out_ref)

    # Accumulate the Gram matrix over feature tiles: G += A_blk @ A_blk^T
    dn = (((1,), (1,)), ((), ()))
    g_ref[...] += lax.dot_general(a, a, dimension_numbers=dn,
                                  preferred_element_type=jnp.float32)

    @pl.when(step == n_steps - 1)
    def _():
        g = g_ref[...]
        g3 = g * g * g
        # Single output write; normalization (1 / (N^2 * D^3)) done in wrapper.
        out_ref[...] = jnp.sum(g3, axis=1, keepdims=True).sum(
            axis=0, keepdims=True)


def _pick_feature_tile(d):
    # Full-width block for moderate D; 128-multiple tiles for very large D so
    # the per-step (N, tk) f32 blocks stay well inside v7x's smaller VMEM.
    if d <= 1024:
        return d
    for tk in (512, 256, 128):
        if d % tk == 0:
            return tk
    return d  # odd large D: fall back to a single full-width block


def hommd_loss(xs, xt):
    assert xs.shape == xt.shape and xs.ndim == 2
    n, d = xs.shape
    tk = _pick_feature_tile(d)
    grid = (d // tk,)
    out = pl.pallas_call(
        hommd_kernel,
        out_shape=jax.ShapeDtypeStruct((1, 1), jnp.float32),
        grid_spec=pltpu.PrefetchScalarGridSpec(
            num_scalar_prefetch=0,
            grid=grid,
            in_specs=[
                pl.BlockSpec((n, tk), lambda i: (0, i)),
                pl.BlockSpec((n, tk), lambda i: (0, i)),
            ],
            out_specs=pl.BlockSpec((1, 1), lambda i: (0, 0)),
            scratch_shapes=[pltpu.VMEM((2 * n, 2 * n), jnp.float32)],
        ),
        compiler_params=pltpu.CompilerParams(
            dimension_semantics=("arbitrary",)),
    )(xs, xt)
    return out[0, 0] * (1.0 / (float(n) ** 2 * float(d) ** 3))


def hommd_loss_ref(xs, xt):
    xs = xs - jnp.mean(xs, axis=0)
    xt = xt - jnp.mean(xt, axis=0)
    hr_s = jnp.mean(jnp.einsum("ni,nj,nk->nijk", xs, xs, xs), axis=0)
    hr_t = jnp.mean(jnp.einsum("ni,nj,nk->nijk", xt, xt, xt), axis=0)
    return jnp.mean((hr_s - hr_t) ** 2)


if __name__ == "__main__":
    key = jax.random.PRNGKey(0)
    k1, k2 = jax.random.split(key)
    N, D = 8, 32
    xs = jax.random.normal(k1, (N, D), dtype=jnp.float32)
    xt = jax.random.normal(k2, (N, D), dtype=jnp.float32) * 0.9 + 0.1

    loss = jax.block_until_ready(hommd_loss(xs, xt))
    ref = jax.block_until_ready(hommd_loss_ref(xs, xt))

    assert jnp.allclose(loss, ref, rtol=1e-4, atol=1e-6), (loss, ref)
    print("KERNEL_OK")
</pallas_src>

<mosaic_0001>
module attributes {stable_mosaic.version = 11 : i64} {
  func.func @hommd_kernel(%arg0: i32, %arg1: memref<8x32xf32, #tpu.memory_space<vmem>>, %arg2: memref<8x32xf32, #tpu.memory_space<vmem>>, %arg3: memref<1x1xf32, #tpu.memory_space<vmem>>, %arg4: memref<16x16xf32, #tpu.memory_space<vmem>>) attributes {dimension_semantics = [#tpu.dimension_semantics<arbitrary>], iteration_bounds = array<i64: 1>, scalar_prefetch = 0 : i64, scratch_operands = 1 : i64, tpu.core_type = #tpu.core_type<tc>, window_params = [{transform_indices = @transform_0, window_bounds = array<i64: 8, 32>}, {transform_indices = @transform_1, window_bounds = array<i64: 8, 32>}, {pipeline_mode = #tpu.pipeline_mode<synchronous>, transform_indices = @transform_2, window_bounds = array<i64: 1, 1>}]} {
    %c0 = arith.constant 0 : index
    %c0_0 = arith.constant 0 : index
    %0 = vector.load %arg1[%c0, %c0_0] : memref<8x32xf32, #tpu.memory_space<vmem>>, vector<8x32xf32>
    %c0_1 = arith.constant 0 : index
    %c0_2 = arith.constant 0 : index
    %1 = vector.load %arg2[%c0_1, %c0_2] : memref<8x32xf32, #tpu.memory_space<vmem>>, vector<8x32xf32>
    %cst = arith.constant dense<0.000000e+00> : vector<32xf32>
    %2 = vector.multi_reduction <add>, %0, %cst [0] : vector<8x32xf32> to vector<32xf32>
    %3 = vector.shape_cast %2 : vector<32xf32> to vector<1x32xf32>
    %cst_3 = arith.constant 8.000000e+00 : f32
    %4 = vector.broadcast %cst_3 : f32 to vector<1x32xf32>
    %5 = arith.divf %3, %4 : vector<1x32xf32>
    %6 = vector.broadcast %5 : vector<1x32xf32> to vector<8x32xf32>
    %7 = arith.subf %0, %6 : vector<8x32xf32>
    %cst_4 = arith.constant dense<0.000000e+00> : vector<32xf32>
    %8 = vector.multi_reduction <add>, %1, %cst_4 [0] : vector<8x32xf32> to vector<32xf32>
    %9 = vector.shape_cast %8 : vector<32xf32> to vector<1x32xf32>
    %cst_5 = arith.constant 8.000000e+00 : f32
    %10 = vector.broadcast %cst_5 : f32 to vector<1x32xf32>
    %11 = arith.divf %9, %10 : vector<1x32xf32>
    %12 = vector.broadcast %11 : vector<1x32xf32> to vector<8x32xf32>
    %13 = arith.subf %1, %12 : vector<8x32xf32>
    %cst_6 = arith.constant 0.000000e+00 : f32
    %14 = vector.broadcast %cst_6 : f32 to vector<8x32xf32>
    %15 = arith.subf %14, %13 : vector<8x32xf32>
    %16 = tpu.concatenate %7, %15 in 0 : vector<8x32xf32>, vector<8x32xf32> -> vector<16x32xf32>
    %c0_i32 = arith.constant 0 : i32
    %17 = arith.cmpi eq, %arg0, %c0_i32 : i32
    %18 = arith.extui %17 : i1 to i32
    %c0_i32_7 = arith.constant 0 : i32
    %19 = arith.cmpi ne, %18, %c0_i32_7 : i32
    scf.if %19 {
      %cst_15 = arith.constant 0.000000e+00 : f32
      %27 = vector.broadcast %cst_15 : f32 to vector<16x16xf32>
      %c0_16 = arith.constant 0 : index
      %c0_17 = arith.constant 0 : index
      %28 = vector.load %arg4[%c0_16, %c0_17] : memref<16x16xf32, #tpu.memory_space<vmem>>, vector<16x16xf32>
      tpu.vector_store %arg4[%c0_16, %c0_17], %27 {strides = array<i32>} : memref<16x16xf32, #tpu.memory_space<vmem>>, vector<16x16xf32>,
      %cst_18 = arith.constant 0.000000e+00 : f32
      %29 = vector.broadcast %cst_18 : f32 to vector<1x1xf32>
      %c0_19 = arith.constant 0 : index
      %c0_20 = arith.constant 0 : index
      %30 = vector.load %arg3[%c0_19, %c0_20] : memref<1x1xf32, #tpu.memory_space<vmem>>, vector<1x1xf32>
      tpu.vector_store %arg3[%c0_19, %c0_20], %29 {strides = array<i32>} : memref<1x1xf32, #tpu.memory_space<vmem>>, vector<1x1xf32>,
    } else {
    }
    %c0_8 = arith.constant 0 : index
    %c0_9 = arith.constant 0 : index
    %20 = vector.load %arg4[%c0_8, %c0_9] : memref<16x16xf32, #tpu.memory_space<vmem>>, vector<16x16xf32>
    %cst_10 = arith.constant dense<0.000000e+00> : vector<16x16xf32>
    %21 = tpu.matmul %16, %16, %cst_10 {dimension_numbers = #tpu.dot_dimension_numbers<[1], [1], [0], [0], [0, 0, 1, 0], [], []>} : vector<16x32xf32>, vector<16x32xf32>, vector<16x16xf32> -> vector<16x16xf32>
    %22 = arith.addf %20, %21 : vector<16x16xf32>
    %c0_11 = arith.constant 0 : index
    %c0_12 = arith.constant 0 : index
    %23 = vector.load %arg4[%c0_11, %c0_12] : memref<16x16xf32, #tpu.memory_space<vmem>>, vector<16x16xf32>
    tpu.vector_store %arg4[%c0_11, %c0_12], %22 {strides = array<i32>} : memref<16x16xf32, #tpu.memory_space<vmem>>, vector<16x16xf32>,
    %c0_i32_13 = arith.constant 0 : i32
    %24 = arith.cmpi eq, %arg0, %c0_i32_13 : i32
    %25 = arith.extui %24 : i1 to i32
    %c0_i32_14 = arith.constant 0 : i32
    %26 = arith.cmpi ne, %25, %c0_i32_14 : i32
    scf.if %26 {
      %c0_15 = arith.constant 0 : index
      %c0_16 = arith.constant 0 : index
      %27 = vector.load %arg4[%c0_15, %c0_16] : memref<16x16xf32, #tpu.memory_space<vmem>>, vector<16x16xf32>
      %28 = arith.mulf %27, %27 : vector<16x16xf32>
      %29 = arith.mulf %28, %27 : vector<16x16xf32>
      %cst_17 = arith.constant dense<0.000000e+00> : vector<16xf32>
      %30 = vector.multi_reduction <add>, %29, %cst_17 [1] : vector<16x16xf32> to vector<16xf32>
      %31 = vector.shape_cast %30 : vector<16xf32> to vector<16x1xf32>
      %cst_18 = arith.constant dense<0.000000e+00> : vector<1xf32>
      %32 = vector.multi_reduction <add>, %31, %cst_18 [0] : vector<16x1xf32> to vector<1xf32>
      %33 = vector.shape_cast %32 : vector<1xf32> to vector<1x1xf32>
      %c0_19 = arith.constant 0 : index
      %c0_20 = arith.constant 0 : index
      %34 = vector.load %arg3[%c0_19, %c0_20] : memref<1x1xf32, #tpu.memory_space<vmem>>, vector<1x1xf32>
      tpu.vector_store %arg3[%c0_19, %c0_20], %33 {strides = array<i32>} : memref<1x1xf32, #tpu.memory_space<vmem>>, vector<1x1xf32>,
    } else {
    }
    return
  }
  func.func @transform_0(%arg0: i32) -> (i32, i32) {
    %c0_i32 = arith.constant 0 : i32
    %c0_i32_0 = arith.constant 0 : i32
    return %c0_i32, %arg0 : i32, i32
  }
  func.func @transform_1(%arg0: i32) -> (i32, i32) {
    %c0_i32 = arith.constant 0 : i32
    %c0_i32_0 = arith.constant 0 : i32
    return %c0_i32, %arg0 : i32, i32
  }
  func.func @transform_2(%arg0: i32) -> (i32, i32) {
    %c0_i32 = arith.constant 0 : i32
    %c0_i32_0 = arith.constant 0 : i32
    %c0_i32_1 = arith.constant 0 : i32
    return %c0_i32, %c0_i32_0 : i32, i32
  }
}

</mosaic_0001>

<llo_original>
// kernel: tpu_custom_call.1
$region0: #{tpu_custom_call.1}
  #allocation0 [shape = 'u32[]', space=smem, size = 0x4, offset = 0x4, fixed_abs, tag = 'smem constant byte address 0x4 - core index']
  #allocation1 [shape = 'u32[144,128]{1,0:T(1,128)}', space=vmem, size = 0x12000, scoped, tag = 'internal scratch']
  #allocation2 [shape = 'f32[16,16]{1,0:T(8,128)}', space=vmem, size = 0x2000, scoped, tag = 'scratch operand']
  %s0 = inlined_call_operand.hbm [shape: f32[8,32], index: 0, kind: input, shape index: {}]
  %s1 = inlined_call_operand.hbm [shape: f32[8,32], index: 1, kind: input, shape index: {}]
  %s2 = inlined_call_operand.hbm [shape: f32[1,1], index: 2, kind: output, shape index: {}]
  %s3 = sld [smem:[#allocation0]]
  $region34: #{tpu_custom_call.1} parent=0
    _
  %s5 = ssub.s32 1, %s3
  %s6 = scalar_select 0, %s5, %s3
  $region1: #{tpu_custom_call.1} parent=0
    #allocation3 [shape = 'u8[4096]{0}', space=vmem, size = 0x1000, scoped, tag = 'input window, operand 0, single buffered']
    #allocation4 [shape = 's32[1]{0}', space=sflag, size = 0x4, scoped, tag = 'scoped memory for tpu_custom_call.1']
    #allocation5 [shape = 's32[1]{0}', space=sflag, size = 0x4, scoped, tag = 'scoped memory for tpu_custom_call.1']
    #allocation6 [shape = 'u8[4096]{0}', space=vmem, size = 0x1000, scoped, tag = 'input window, operand 1, single buffered']
    #allocation7 [shape = 's32[1]{0}', space=sflag, size = 0x4, scoped, tag = 'scoped memory for tpu_custom_call.1']
    #allocation8 [shape = 'u8[512]{0}', space=vmem, size = 0x400, scoped, tag = 'output window, operand 0, single buffered']
    %7 = vsyncpa [#allocation4], 0
    %8 = vsyncpa [#allocation7], 0
    %9 = vsyncpa [#allocation5], 0
    // Predicated region
    $region2: #{tpu_custom_call.1} parent=1 // pred_check
      _
    $region3: #{tpu_custom_call.1} parent=1 // pred_check_branch
      %11 = sbr.rel (0) target = $region5
    $region4: #{tpu_custom_call.1} parent=1 // pred_region
      %s13 = ssub.s32 128, 128
      %14 = vsyncadd [#allocation4], %s13
      %s16 = sshll.u32 [#allocation3], 4
      %s17 = int_to_ptr.vmem [resolvable:$true] %s16
      %19 = dma.hbm_to_vmem [thread:$0]  %s0, 128, %s17, [#allocation4]
    $region5: #{tpu_custom_call.1} parent=1 // pred_fallthru
      _
    // Predicated region
    $region6: #{tpu_custom_call.1} parent=1 // pred_check
      _
    $region7: #{tpu_custom_call.1} parent=1 // pred_check_branch
      %21 = sbr.rel (0) target = $region9
    $region8: #{tpu_custom_call.1} parent=1 // pred_region
      %s23 = ssub.s32 128, 128
      %24 = vsyncadd [#allocation7], %s23
      %s26 = sshll.u32 [#allocation6], 4
      %s27 = int_to_ptr.vmem [resolvable:$true] %s26
      %29 = dma.hbm_to_vmem [thread:$0]  %s1, 128, %s27, [#allocation7]
    $region9: #{tpu_custom_call.1} parent=1 // pred_fallthru
      _
    // Predicated region
    $region10: #{tpu_custom_call.1} parent=1 // pred_check
      _
    $region11: #{tpu_custom_call.1} parent=1 // pred_check_branch
      %31 = sbr.rel (0) target = $region13
    $region12: #{tpu_custom_call.1} parent=1 // pred_region
      %32 = dma.done [#allocation4], 128
    $region13: #{tpu_custom_call.1} parent=1 // pred_fallthru
      _
    // Predicated region
    $region14: #{tpu_custom_call.1} parent=1 // pred_check
      _
    $region15: #{tpu_custom_call.1} parent=1 // pred_check_branch
      %34 = sbr.rel (0) target = $region17
    $region16: #{tpu_custom_call.1} parent=1 // pred_region
      %35 = dma.done [#allocation7], 128
    $region17: #{tpu_custom_call.1} parent=1 // pred_fallthru
      _
    %v36 = vld [vmem:[#allocation3] sm:$0xff]
    %v37 = vld [vmem:[#allocation6] sm:$0xff]
    %vm38 = vcmask 261120
    %v39 = vsel %vm38, %v36, 0.0
    %v40 = vrot.slane %v39, 4
    %v41 = vadd.f32 %v39, %v40
    %v42 = vrot.slane %v41, 2
    %v43 = vadd.f32 %v41, %v42
    %v44 = vrot.slane %v43, 1
    %v45 = vadd.f32 %v43, %v44
    %v46 = vrcp.pop 8.0
    %v47 = vmul.f32 %v45, %v46
    %v48 = vsub.f32 %v36, %v47
    %v49 = vsel %vm38, %v37, 0.0
    %v50 = vrot.slane %v49, 4
    %v51 = vadd.f32 %v49, %v50
    %v52 = vrot.slane %v51, 2
    %v53 = vadd.f32 %v51, %v52
    %v54 = vrot.slane %v53, 1
    %v55 = vadd.f32 %v53, %v54
    %v56 = vmul.f32 %v55, %v46
    %v57 = vsub.f32 %v37, %v56
    %v58 = vsub.f32 0.0, %v57
    %p59 = scmp.eq.s32.totalorder 0, 0
    // Predicated region
    $region18: #{tpu_custom_call.1} parent=1 // pred_check
      %p60 = pneg %p59
    $region19: #{tpu_custom_call.1} parent=1 // pred_check_branch
      %62 = sbr.rel (%p60) target = $region21
    $region20: #{tpu_custom_call.1} parent=1 // pred_region
      %vm63 = vcmask 130048
      %64 = vst.msk [vmem:[#allocation2] sm:$0xff] %vm63, 0.0
      %65 = vst.msk [vmem:[#allocation2 + $0x8] sm:$0xff] %vm63, 0.0
      %vm66 = vcmask 0
      %67 = vst.msk [vmem:[#allocation8] sm:$0x1] %vm66, 0.0
    $region21: #{tpu_custom_call.1} parent=1 // pred_fallthru
      _
    %v68 = vld [vmem:[#allocation2] sm:$0xff]
    %v69 = vld [vmem:[#allocation2 + $0x8] sm:$0xff]
    %v71 = vsel %vm38, %v48, 0
    %v74 = vsel %vm38, %v58, 0
    %76 = vmatprep.subr.mxu0 0.0
    %77 = vmatpush1.xpose.msra.mxu0 %v71
    %78 = vmatprep.subr.mxu0 0.0
    %79 = vmatpush1.xpose.msra.mxu0 %v74
    %80 = vmatprep.subr.mxu0 0.0
    %81 = vmatpush1.xpose.msra.mxu0 0.0
    %82 = vmatprep.subr.mxu0 0.0
    %83 = vmatpush1.xpose.msra.mxu0 0.0
    %84 = vmatprep.subr.mxu0 0.0
    %85 = vmatpush1.xpose.msra.mxu0 0.0
    %86 = vmatprep.subr.mxu0 0.0
    %87 = vmatpush1.xpose.msra.mxu0 0.0
    %88 = vmatprep.subr.mxu0 0.0
    %89 = vmatpush1.xpose.msra.mxu0 0.0
    %90 = vmatprep.subr.mxu0 0.0
    %91 = vmatpush1.xpose.msra.mxu0 0.0
    %92 = vmatprep.subr.mxu0 0.0
    %93 = vmatpush1.xpose.msra.mxu0 0.0
    %94 = vmatprep.subr.mxu0 0.0
    %95 = vmatpush1.xpose.msra.mxu0 0.0
    %96 = vmatprep.subr.mxu0 0.0
    %97 = vmatpush1.xpose.msra.mxu0 0.0
    %98 = vmatprep.subr.mxu0 0.0
    %99 = vmatpush1.xpose.msra.mxu0 0.0
    %100 = vmatprep.subr.mxu0 0.0
    %101 = vmatpush1.xpose.msra.mxu0 0.0
    %102 = vmatprep.subr.mxu0 0.0
    %103 = vmatpush1.xpose.msra.mxu0 0.0
    %104 = vmatprep.subr.mxu0 0.0
    %105 = vmatpush1.xpose.msra.mxu0 0.0
    %106 = vmatprep.subr.mxu0 0.0
    %107 = vmatpush1.xpose.msra.mxu0 0.0
    %108 = vmatprep.subr.mxu0 0.0
    %109 = vmatpush1.xpose.msra.mxu0 0.0
    %110 = vmatprep.subr.mxu0 0.0
    %111 = vmatpush1.xpose.msra.mxu0 0.0
    %112 = vmatprep.subr.mxu0 0.0
    %113 = vmatpush1.xpose.msra.mxu0 0.0
    %114 = vmatprep.subr.mxu0 0.0
    %115 = vmatpush1.xpose.msra.mxu0 0.0
    %116 = vmatprep.subr.mxu0 0.0
    %117 = vmatpush1.xpose.msra.mxu0 0.0
    %118 = vmatprep.subr.mxu0 0.0
    %119 = vmatpush1.xpose.msra.mxu0 0.0
    %120 = vmatprep.subr.mxu0 0.0
    %121 = vmatpush1.xpose.msra.mxu0 0.0
    %122 = vmatprep.subr.mxu0 0.0
    %123 = vmatpush1.xpose.msra.mxu0 0.0
    %124 = vmatprep.subr.mxu0 0.0
    %125 = vmatpush1.xpose.msra.mxu0 0.0
    %126 = vmatprep.subr.mxu0 0.0
    %127 = vmatpush1.xpose.msra.mxu0 0.0
    %128 = vmatprep.subr.mxu0 0.0
    %129 = vmatpush1.xpose.msra.mxu0 0.0
    %130 = vmatprep.subr.mxu0 0.0
    %131 = vmatpush1.xpose.msra.mxu0 0.0
    %132 = vmatprep.subr.mxu0 0.0
    %133 = vmatpush1.xpose.msra.mxu0 0.0
    %134 = vmatprep.subr.mxu0 0.0
    %135 = vmatpush1.xpose.msra.mxu0 0.0
    %136 = vmatprep.subr.mxu0 0.0
    %137 = vmatpush1.xpose.msra.mxu0 0.0
    %138 = vmatprep.subr.mxu0 0.0
    %139 = vmatpush1.xpose.msra.mxu0 0.0
    %140 = vmatprep.mubr.f32.mxu0 0.0
    %141 = vmatmul.mubr.f32.gmra.mrb[0].mxu0 %v71
    %v142 = vpop.f32.mrb[0].mxu0
    %v143 = vadd.f32 0.0, %v142
    %v144 = vpop.f32.mrb[0].mxu0
    %145 = vmatprep.mubr.f32.mxu0 0.0
    %146 = vmatmul.mubr.f32.gmra.mrb[0].mxu0 %v74
    %v147 = vpop.f32.mrb[0].mxu0
    %v148 = vadd.f32 0.0, %v147
    %v149 = vpop.f32.mrb[0].mxu0
    %150 = vdwg.mxu0
    %v151 = vadd.f32 %v68, %v143
    %v152 = vadd.f32 %v69, %v148
    %vm153 = vcmask 130048
    %154 = vst.msk [vmem:[#allocation2] sm:$0xff] %vm153, %v151
    %155 = vst.msk [vmem:[#allocation2 + $0x8] sm:$0xff] %vm153, %v152
    // Predicated region
    $region22: #{tpu_custom_call.1} parent=1 // pred_check
      %p156 = pneg %p59
    $region23: #{tpu_custom_call.1} parent=1 // pred_check_branch
      %158 = sbr.rel (%p156) target = $region25
    $region24: #{tpu_custom_call.1} parent=1 // pred_region
      %v159 = vld [vmem:[#allocation2] sm:$0xff]
      %v160 = vld [vmem:[#allocation2 + $0x8] sm:$0xff]
      %v161 = vmul.f32 %v159, %v159
      %v162 = vmul.f32 %v160, %v160
      %v163 = vmul.f32 %v161, %v159
      %v164 = vmul.f32 %v162, %v160
      %v165 = vsel %vm153, %v163, 0.0
      %166 = vadd.xlane.f32.xlu0 %v165
      %v167 = vpop.xlane.xlu0 %166
      %v168 = vsel %vm153, %v164, 0.0
      %169 = vadd.xlane.f32.xlu0 %v168
      %v170 = vpop.xlane.xlu0 %169
      %v171 = vadd.f32 %v167, %v170
      %v172 = vrot.slane %v171, 4
      %v173 = vadd.f32 %v171, %v172
      %v174 = vrot.slane %v173, 2
      %v175 = vadd.f32 %v173, %v174
      %v176 = vrot.slane %v175, 1
      %v177 = vadd.f32 %v175, %v176
      %vm178 = vcmask 0
      %179 = vst.msk [vmem:[#allocation8] sm:$0x1] %vm178, %v177
    $region25: #{tpu_custom_call.1} parent=1 // pred_fallthru
      _
    // Predicated region
    $region26: #{tpu_custom_call.1} parent=1 // pred_check
      _
    $region27: #{tpu_custom_call.1} parent=1 // pred_check_branch
      %181 = sbr.rel (0) target = $region29
    $region28: #{tpu_custom_call.1} parent=1 // pred_region
      %s183 = ssub.s32 16, 16
      %184 = vsyncadd [#allocation5], %s183
      %s186 = sshll.u32 [#allocation8], 4
      %s187 = int_to_ptr.vmem [resolvable:$true] %s186
      %189 = dma.vmem_to_hbm [thread:$0]  %s187, 16, %s2, [#allocation5]
    $region29: #{tpu_custom_call.1} parent=1 // pred_fallthru
      _
    // Predicated region
    $region30: #{tpu_custom_call.1} parent=1 // pred_check
      _
    $region31: #{tpu_custom_call.1} parent=1 // pred_check_branch
      %191 = sbr.rel (0) target = $region33
    $region32: #{tpu_custom_call.1} parent=1 // pred_region
      %192 = dma.done [#allocation5], 16
    $region33: #{tpu_custom_call.1} parent=1 // pred_fallthru
      _
    %193 = vsyncpa [#allocation4], 1
    %194 = vsyncpa [#allocation7], 1
    %195 = vsyncpa [#allocation5], 1

</llo_original>
